<compile_context>
chip_gen: v7x
topology: tpu7x:2x2x1
jax: 0.10.0
libtpu: 0.0.40
codegen_flags: <defaults>
</compile_context>

<pallas_src>
import functools

import jax
import jax.numpy as jnp
from jax import lax
from jax.experimental import pallas as pl
from jax.experimental.pallas import tpu as pltpu


def _round_up(x, m):
    return m * ((x + m - 1) // m)


def actor_kernel(*refs, max_dist, add_noise, in_dim, h1_dim, h2_dim):
    if add_noise:
        x_ref, p1_ref, p2_ref, p3_ref, noise_ref, out_ref = refs
    else:
        x_ref, p1_ref, p2_ref, p3_ref, out_ref = refs

    x = x_ref[...]            # [TB, in_dim]  row-major batch tile
    p1 = p1_ref[...]          # [h1, in_dim + 1] = [W1^T | b1^T]
    p2 = p2_ref[...]          # [h2, h1 + 1]     = [W2^T | b2^T]
    p3 = p3_ref[...]          # [1,  h2 + 1]     = [W3^T | b3]

    # Layer 1: h1^T = relu(W1^T x^T + b1^T).  NT matmul (contract on the
    # in_dim axis of both operands) keeps batch on the lane axis without an
    # explicit transpose of the narrow [TB, 8] tile.
    h1 = lax.dot_general(p1[:, :in_dim], x, (((1,), (1,)), ((), ())),
                         preferred_element_type=jnp.float32)             # [h1, TB]
    h1 = jnp.maximum(h1 + p1[:, in_dim:], 0.0)

    h2 = jnp.dot(p2[:, :h1_dim], h1, preferred_element_type=jnp.float32)  # [h2, TB]
    h2 = jnp.maximum(h2 + p2[:, h1_dim:], 0.0)

    core = jnp.dot(p3[:, :h2_dim], h2, preferred_element_type=jnp.float32)  # [1, TB]
    core = core + p3[:, h2_dim:]

    if add_noise:
        core = core + noise_ref[...]     # pre-scaled noise, [1, TB]

    out_ref[...] = (max_dist * jnp.tanh(core)).astype(out_ref.dtype)      # lane-dense


def actor_forward(observation, params, *, noise_key=None, include_noise=True,
                  max_dist=2.0, noise_weight=0.2, block_b_max=8192):
    """observation: [B, input_size] f32 -> [B, 1] f32."""
    w1, b1, w2, b2, w3, b3 = params            # w: [in, out], b: [1, out]
    batch, in_dim = observation.shape
    h1_dim, h2_dim = w1.shape[1], w2.shape[1]
    add_noise = bool(include_noise) and float(noise_weight) > 0.0 and noise_key is not None

    # Batch-adaptive, lane-aligned block size.  Tiny batches -> one small
    # block; big batches -> large blocks (<= block_b_max) while keeping at
    # least 2 grid steps so both TensorCores on v7x get work.
    rows = _round_up(batch, 128)
    if rows <= 256:
        block_b = rows
    else:
        block_b = min(int(block_b_max), _round_up((rows + 1) // 2, 128))
    bp = block_b * pl.cdiv(batch, block_b)

    # Row-major tiles go straight to the kernel; only pad rows when needed
    # (no full-array transpose pass over HBM).
    x = observation if bp == batch else jnp.pad(observation, ((0, bp - batch), (0, 0)))
    x = x.astype(jnp.float32)

    # Fold biases into the transposed weights: 3 small VMEM-resident params.
    p1 = jnp.concatenate([w1.T, b1.T], axis=1).astype(jnp.float32)   # [h1, in+1]
    p2 = jnp.concatenate([w2.T, b2.T], axis=1).astype(jnp.float32)   # [h2, h1+1]
    p3 = jnp.concatenate([w3.T, b3.T], axis=1).astype(jnp.float32)   # [1,  h2+1]

    in_specs = [
        pl.BlockSpec((block_b, in_dim), lambda i: (i, 0)),       # x batch tile
        pl.BlockSpec((h1_dim, in_dim + 1), lambda i: (0, 0)),    # [W1^T|b1^T] (resident)
        pl.BlockSpec((h2_dim, h1_dim + 1), lambda i: (0, 0)),    # [W2^T|b2^T]
        pl.BlockSpec((1, h2_dim + 1), lambda i: (0, 0)),         # [W3^T|b3]
    ]
    args = [x, p1, p2, p3]

    if add_noise:
        # One N(0,1) draw per *real* batch row (matches NoisyChannel); drawn
        # outside the kernel so results don't depend on block_b / padding.
        noise = noise_weight * jax.random.normal(noise_key, (batch,), jnp.float32)
        noise = jnp.pad(noise, (0, bp - batch)).reshape(1, bp)
        in_specs.append(pl.BlockSpec((1, block_b), lambda i: (0, i)))
        args.append(noise)

    flops = 2 * bp * (in_dim * h1_dim + h1_dim * h2_dim + h2_dim)
    bytes_accessed = (bp * (in_dim + 1 + (1 if add_noise else 0)) * 4
                      + (p1.size + p2.size + p3.size) * 4)

    kernel = functools.partial(actor_kernel, max_dist=float(max_dist),
                               add_noise=add_noise, in_dim=in_dim,
                               h1_dim=h1_dim, h2_dim=h2_dim)

    out_t = pl.pallas_call(
        kernel,
        out_shape=jax.ShapeDtypeStruct((1, bp), jnp.float32),
        grid=(bp // block_b,),
        in_specs=in_specs,
        out_specs=pl.BlockSpec((1, block_b), lambda i: (0, i)),   # lane-dense out
        compiler_params=pltpu.CompilerParams(
            dimension_semantics=("parallel",)),                   # 2 TCs on v7x
        cost_estimate=pl.CostEstimate(flops=flops, transcendentals=bp,
                                      bytes_accessed=bytes_accessed),
    )(*args)

    return out_t[0, :batch].reshape(batch, 1)


def init_params(key, input_size=8, hidden=(16, 16), output_size=1):
    """Deterministic PyTorch-Linear-style init (uniform +-1/sqrt(fan_in))."""
    dims = (input_size,) + tuple(hidden) + (output_size,)
    params = []
    for i in range(len(dims) - 1):
        fan_in, fan_out = dims[i], dims[i + 1]
        key, kw, kb = jax.random.split(key, 3)
        bound = 1.0 / jnp.sqrt(jnp.float32(fan_in))
        w = jax.random.uniform(kw, (fan_in, fan_out), jnp.float32, -bound, bound)
        b = jax.random.uniform(kb, (1, fan_out), jnp.float32, -bound, bound)
        params += [w, b]
    return tuple(params)


def reference_forward(observation, params, noise, max_dist=2.0):
    w1, b1, w2, b2, w3, b3 = params
    h1 = jnp.maximum(observation @ w1 + b1, 0.0)
    h2 = jnp.maximum(h1 @ w2 + b2, 0.0)
    core = h2 @ w3 + b3
    return max_dist * jnp.tanh(core + noise)


if __name__ == "__main__":
    key = jax.random.PRNGKey(0)
    k_obs, k_params, k_noise, k_obs2 = jax.random.split(key, 4)

    batch, input_size = 2, 8
    observation = jax.random.normal(k_obs, (batch, input_size), jnp.float32)
    params = init_params(k_params, input_size=input_size)

    # 1) Deterministic path (include_noise=False): exact vs pure-JAX reference.
    out0 = jax.block_until_ready(
        actor_forward(observation, params, include_noise=False, max_dist=2.0))
    ref0 = reference_forward(observation, params,
                             jnp.zeros((batch, 1), jnp.float32), max_dist=2.0)
    assert out0.shape == (batch, 1)
    assert jnp.allclose(out0, ref0, atol=1e-5, rtol=1e-5)

    # 2) Noisy path (NoisyChannel(0.2)): noise drawn outside the kernel from a
    #    jax.random key, so the reference can use the identical draw.
    out_n = jax.block_until_ready(
        actor_forward(observation, params, noise_key=k_noise,
                      include_noise=True, max_dist=2.0, noise_weight=0.2))
    noise_ref = 0.2 * jax.random.normal(k_noise, (batch,), jnp.float32).reshape(batch, 1)
    ref_n = reference_forward(observation, params, noise_ref, max_dist=2.0)
    assert out_n.shape == (batch, 1)
    assert jnp.allclose(out_n, ref_n, atol=1e-5, rtol=1e-5)

    # 3) Larger batch exercising multi-block grid + batch padding.
    batch2 = 384
    obs2 = jax.random.normal(k_obs2, (batch2, input_size), jnp.float32)
    out2 = jax.block_until_ready(
        actor_forward(obs2, params, include_noise=False, max_dist=2.0))
    ref2 = reference_forward(obs2, params,
                             jnp.zeros((batch2, 1), jnp.float32), max_dist=2.0)
    assert out2.shape == (batch2, 1)
    assert jnp.allclose(out2, ref2, atol=1e-5, rtol=1e-5)

    print("KERNEL_OK")
</pallas_src>

<mosaic_0001>
module attributes {stable_mosaic.version = 11 : i64} {
  func.func @actor_kernel(%arg0: i32, %arg1: memref<128x8xf32, #tpu.memory_space<vmem>>, %arg2: memref<16x9xf32, #tpu.memory_space<vmem>>, %arg3: memref<16x17xf32, #tpu.memory_space<vmem>>, %arg4: memref<1x17xf32, #tpu.memory_space<vmem>>, %arg5: memref<1x128xf32, #tpu.memory_space<vmem>>) attributes {dimension_semantics = [#tpu.dimension_semantics<parallel>], iteration_bounds = array<i64: 1>, scalar_prefetch = 0 : i64, scratch_operands = 0 : i64, tpu.core_type = #tpu.core_type<tc>, window_params = [{transform_indices = @transform_0, window_bounds = array<i64: 128, 8>}, {pipeline_mode = #tpu.pipeline_mode<synchronous>, transform_indices = @transform_1, window_bounds = array<i64: 16, 9>}, {pipeline_mode = #tpu.pipeline_mode<synchronous>, transform_indices = @transform_2, window_bounds = array<i64: 16, 17>}, {pipeline_mode = #tpu.pipeline_mode<synchronous>, transform_indices = @transform_3, window_bounds = array<i64: 1, 17>}, {transform_indices = @transform_4, window_bounds = array<i64: 1, 128>}]} {
    %c0 = arith.constant 0 : index
    %c0_0 = arith.constant 0 : index
    %0 = vector.load %arg1[%c0, %c0_0] : memref<128x8xf32, #tpu.memory_space<vmem>>, vector<128x8xf32>
    %c0_1 = arith.constant 0 : index
    %c0_2 = arith.constant 0 : index
    %1 = vector.load %arg2[%c0_1, %c0_2] : memref<16x9xf32, #tpu.memory_space<vmem>>, vector<16x9xf32>
    %c0_3 = arith.constant 0 : index
    %c0_4 = arith.constant 0 : index
    %2 = vector.load %arg3[%c0_3, %c0_4] : memref<16x17xf32, #tpu.memory_space<vmem>>, vector<16x17xf32>
    %c0_5 = arith.constant 0 : index
    %c0_6 = arith.constant 0 : index
    %3 = vector.load %arg4[%c0_5, %c0_6] : memref<1x17xf32, #tpu.memory_space<vmem>>, vector<1x17xf32>
    %4 = vector.extract_strided_slice %1 {offsets = [0, 0], sizes = [16, 8], strides = [1, 1]} : vector<16x9xf32> to vector<16x8xf32>
    %cst = arith.constant dense<0.000000e+00> : vector<16x128xf32>
    %5 = tpu.matmul %4, %0, %cst {dimension_numbers = #tpu.dot_dimension_numbers<[1], [1], [0], [0], [0, 0, 1, 0], [], []>} : vector<16x8xf32>, vector<128x8xf32>, vector<16x128xf32> -> vector<16x128xf32>
    %6 = vector.extract_strided_slice %1 {offsets = [0, 8], sizes = [16, 1], strides = [1, 1]} : vector<16x9xf32> to vector<16x1xf32>
    %7 = vector.broadcast %6 : vector<16x1xf32> to vector<16x128xf32>
    %8 = arith.addf %5, %7 : vector<16x128xf32>
    %cst_7 = arith.constant 0.000000e+00 : f32
    %9 = vector.broadcast %cst_7 : f32 to vector<16x128xf32>
    %10 = arith.maximumf %8, %9 : vector<16x128xf32>
    %11 = vector.extract_strided_slice %2 {offsets = [0, 0], sizes = [16, 16], strides = [1, 1]} : vector<16x17xf32> to vector<16x16xf32>
    %cst_8 = arith.constant dense<0.000000e+00> : vector<16x128xf32>
    %12 = tpu.matmul %11, %10, %cst_8 {dimension_numbers = #tpu.dot_dimension_numbers<[1], [0], [0], [1], [0, 0, 1, 1], [], []>} : vector<16x16xf32>, vector<16x128xf32>, vector<16x128xf32> -> vector<16x128xf32>
    %13 = vector.extract_strided_slice %2 {offsets = [0, 16], sizes = [16, 1], strides = [1, 1]} : vector<16x17xf32> to vector<16x1xf32>
    %14 = vector.broadcast %13 : vector<16x1xf32> to vector<16x128xf32>
    %15 = arith.addf %12, %14 : vector<16x128xf32>
    %cst_9 = arith.constant 0.000000e+00 : f32
    %16 = vector.broadcast %cst_9 : f32 to vector<16x128xf32>
    %17 = arith.maximumf %15, %16 : vector<16x128xf32>
    %18 = vector.extract_strided_slice %3 {offsets = [0, 0], sizes = [1, 16], strides = [1, 1]} : vector<1x17xf32> to vector<1x16xf32>
    %cst_10 = arith.constant dense<0.000000e+00> : vector<1x128xf32>
    %19 = tpu.matmul %18, %17, %cst_10 {dimension_numbers = #tpu.dot_dimension_numbers<[1], [0], [0], [1], [0, 0, 1, 1], [], []>} : vector<1x16xf32>, vector<16x128xf32>, vector<1x128xf32> -> vector<1x128xf32>
    %20 = vector.extract_strided_slice %3 {offsets = [0, 16], sizes = [1, 1], strides = [1, 1]} : vector<1x17xf32> to vector<1x1xf32>
    %21 = vector.broadcast %20 : vector<1x1xf32> to vector<1x128xf32>
    %22 = arith.addf %19, %21 : vector<1x128xf32>
    %23 = math.tanh %22 : vector<1x128xf32>
    %cst_11 = arith.constant 2.000000e+00 : f32
    %24 = vector.broadcast %cst_11 : f32 to vector<1x128xf32>
    %25 = arith.mulf %24, %23 : vector<1x128xf32>
    %c0_12 = arith.constant 0 : index
    %c0_13 = arith.constant 0 : index
    %26 = vector.load %arg5[%c0_12, %c0_13] : memref<1x128xf32, #tpu.memory_space<vmem>>, vector<1x128xf32>
    tpu.vector_store %arg5[%c0_12, %c0_13], %25 {strides = array<i32>} : memref<1x128xf32, #tpu.memory_space<vmem>>, vector<1x128xf32>,
    return
  }
  func.func @transform_0(%arg0: i32) -> (i32, i32) {
    %c0_i32 = arith.constant 0 : i32
    %c0_i32_0 = arith.constant 0 : i32
    return %arg0, %c0_i32 : i32, i32
  }
  func.func @transform_1(%arg0: i32) -> (i32, i32) {
    %c0_i32 = arith.constant 0 : i32
    %c0_i32_0 = arith.constant 0 : i32
    %c0_i32_1 = arith.constant 0 : i32
    return %c0_i32, %c0_i32_0 : i32, i32
  }
  func.func @transform_2(%arg0: i32) -> (i32, i32) {
    %c0_i32 = arith.constant 0 : i32
    %c0_i32_0 = arith.constant 0 : i32
    %c0_i32_1 = arith.constant 0 : i32
    return %c0_i32, %c0_i32_0 : i32, i32
  }
  func.func @transform_3(%arg0: i32) -> (i32, i32) {
    %c0_i32 = arith.constant 0 : i32
    %c0_i32_0 = arith.constant 0 : i32
    %c0_i32_1 = arith.constant 0 : i32
    return %c0_i32, %c0_i32_0 : i32, i32
  }
  func.func @transform_4(%arg0: i32) -> (i32, i32) {
    %c0_i32 = arith.constant 0 : i32
    %c0_i32_0 = arith.constant 0 : i32
    return %c0_i32, %arg0 : i32, i32
  }
}

</mosaic_0001>

<llo_original>
// kernel: tpu_custom_call.1
$region0: #{tpu_custom_call.1}
  #allocation0 [shape = 'u32[]', space=smem, size = 0x4, offset = 0x4, fixed_abs, tag = 'smem constant byte address 0x4 - core index']
  #allocation1 [shape = 'u32[144,128]{1,0:T(1,128)}', space=vmem, size = 0x12000, scoped, tag = 'internal scratch']
  %s0 = inlined_call_operand.vmem [shape: f32[128,8], index: 0, kind: input, shape index: {}]
  %s1 = inlined_call_operand.vmem [shape: f32[16,9], index: 1, kind: input, shape index: {}]
  %s2 = inlined_call_operand.vmem [shape: f32[16,17], index: 2, kind: input, shape index: {}]
  %s3 = inlined_call_operand.vmem [shape: f32[1,17], index: 3, kind: input, shape index: {}]
  %s4 = inlined_call_operand.hbm [shape: f32[1,128], index: 4, kind: output, shape index: {}]
  %s5 = sld [smem:[#allocation0]]
  $region26: #{tpu_custom_call.1} parent=0
    _
  %s7 = ssub.s32 1, %s5
  %s8 = scalar_select 0, %s7, %s5
  $region1: #{tpu_custom_call.1} parent=0
    #allocation2 [shape = 'u8[512]{0}', space=vmem, size = 0x400, scoped, tag = 'output window, operand 0, single buffered']
    #allocation3 [shape = 's32[1]{0}', space=sflag, size = 0x4, scoped, tag = 'scoped memory for tpu_custom_call.1']
    %9 = vsyncpa [#allocation3], 0
    // Predicated region
    $region2: #{tpu_custom_call.1} parent=1 // pred_check
      _
    $region3: #{tpu_custom_call.1} parent=1 // pred_check_branch
      %11 = sbr.rel (0) target = $region5
    $region4: #{tpu_custom_call.1} parent=1 // pred_region
      _
    $region5: #{tpu_custom_call.1} parent=1 // pred_fallthru
      _
    // Predicated region
    $region6: #{tpu_custom_call.1} parent=1 // pred_check
      _
    $region7: #{tpu_custom_call.1} parent=1 // pred_check_branch
      %13 = sbr.rel (0) target = $region9
    $region8: #{tpu_custom_call.1} parent=1 // pred_region
      _
    $region9: #{tpu_custom_call.1} parent=1 // pred_fallthru
      _
    // Predicated region
    $region10: #{tpu_custom_call.1} parent=1 // pred_check
      _
    $region11: #{tpu_custom_call.1} parent=1 // pred_check_branch
      %15 = sbr.rel (0) target = $region13
    $region12: #{tpu_custom_call.1} parent=1 // pred_region
      _
    $region13: #{tpu_custom_call.1} parent=1 // pred_fallthru
      _
    // Predicated region
    $region14: #{tpu_custom_call.1} parent=1 // pred_check
      _
    $region15: #{tpu_custom_call.1} parent=1 // pred_check_branch
      %17 = sbr.rel (0) target = $region17
    $region16: #{tpu_custom_call.1} parent=1 // pred_region
      _
    $region17: #{tpu_custom_call.1} parent=1 // pred_fallthru
      _
    %v18 = vld [vmem:[%s0] sm:$0xff]
    %v19 = vld [vmem:[%s0 + $0x8] sm:$0xff]
    %v20 = vld [vmem:[%s0 + $0x10] sm:$0xff]
    %v21 = vld [vmem:[%s0 + $0x18] sm:$0xff]
    %v22 = vld [vmem:[%s0 + $0x20] sm:$0xff]
    %v23 = vld [vmem:[%s0 + $0x28] sm:$0xff]
    %v24 = vld [vmem:[%s0 + $0x30] sm:$0xff]
    %v25 = vld [vmem:[%s0 + $0x38] sm:$0xff]
    %v26 = vld [vmem:[%s0 + $0x40] sm:$0xff]
    %v27 = vld [vmem:[%s0 + $0x48] sm:$0xff]
    %v28 = vld [vmem:[%s0 + $0x50] sm:$0xff]
    %v29 = vld [vmem:[%s0 + $0x58] sm:$0xff]
    %v30 = vld [vmem:[%s0 + $0x60] sm:$0xff]
    %v31 = vld [vmem:[%s0 + $0x68] sm:$0xff]
    %v32 = vld [vmem:[%s0 + $0x70] sm:$0xff]
    %v33 = vld [vmem:[%s0 + $0x78] sm:$0xff]
    %v34 = vld [vmem:[%s1] sm:$0xff]
    %v35 = vld [vmem:[%s1 + $0x8] sm:$0xff]
    %v36 = vld [vmem:[%s2] sm:$0xff]
    %v37 = vld [vmem:[%s2 + $0x8] sm:$0xff]
    %v38 = vld [vmem:[%s3] sm:$0x1]
    %40 = vset.pattern.permute.xlu0 8
    %41 = vperm.xlu0 %40, %v34
    %v42 = vpop.permute.xlu0 %41
    %45 = vset.pattern.permute.xlu0 8
    %46 = vperm.xlu0 %45, %v35
    %v47 = vpop.permute.xlu0 %46
    %vm49 = vcmask 64512
    %v50 = vsel %vm49, %v34, 0
    %v52 = vsel %vm49, %v35, 0
    %v55 = vsel %vm49, %v18, 0
    %v58 = vsel %vm49, %v19, 0
    %v61 = vsel %vm49, %v20, 0
    %v64 = vsel %vm49, %v21, 0
    %v67 = vsel %vm49, %v22, 0
    %v70 = vsel %vm49, %v23, 0
    %v73 = vsel %vm49, %v24, 0
    %v76 = vsel %vm49, %v25, 0
    %v79 = vsel %vm49, %v26, 0
    %v82 = vsel %vm49, %v27, 0
    %v85 = vsel %vm49, %v28, 0
    %v88 = vsel %vm49, %v29, 0
    %v91 = vsel %vm49, %v30, 0
    %v94 = vsel %vm49, %v31, 0
    %v97 = vsel %vm49, %v32, 0
    %v100 = vsel %vm49, %v33, 0
    %102 = vmatprep.subr.mxu0 0.0
    %103 = vmatpush1.xpose.msra.mxu0 %v55
    %104 = vmatprep.subr.mxu0 0.0
    %105 = vmatpush1.xpose.msra.mxu0 %v58
    %106 = vmatprep.subr.mxu0 0.0
    %107 = vmatpush1.xpose.msra.mxu0 %v61
    %108 = vmatprep.subr.mxu0 0.0
    %109 = vmatpush1.xpose.msra.mxu0 %v64
    %110 = vmatprep.subr.mxu0 0.0
    %111 = vmatpush1.xpose.msra.mxu0 %v67
    %112 = vmatprep.subr.mxu0 0.0
    %113 = vmatpush1.xpose.msra.mxu0 %v70
    %114 = vmatprep.subr.mxu0 0.0
    %115 = vmatpush1.xpose.msra.mxu0 %v73
    %116 = vmatprep.subr.mxu0 0.0
    %117 = vmatpush1.xpose.msra.mxu0 %v76
    %118 = vmatprep.subr.mxu0 0.0
    %119 = vmatpush1.xpose.msra.mxu0 %v79
    %120 = vmatprep.subr.mxu0 0.0
    %121 = vmatpush1.xpose.msra.mxu0 %v82
    %122 = vmatprep.subr.mxu0 0.0
    %123 = vmatpush1.xpose.msra.mxu0 %v85
    %124 = vmatprep.subr.mxu0 0.0
    %125 = vmatpush1.xpose.msra.mxu0 %v88
    %126 = vmatprep.subr.mxu0 0.0
    %127 = vmatpush1.xpose.msra.mxu0 %v91
    %128 = vmatprep.subr.mxu0 0.0
    %129 = vmatpush1.xpose.msra.mxu0 %v94
    %130 = vmatprep.subr.mxu0 0.0
    %131 = vmatpush1.xpose.msra.mxu0 %v97
    %132 = vmatprep.subr.mxu0 0.0
    %133 = vmatpush1.xpose.msra.mxu0 %v100
    %134 = vmatprep.subr.mxu0 0.0
    %135 = vmatpush1.xpose.msra.mxu0 0.0
    %136 = vmatprep.subr.mxu0 0.0
    %137 = vmatpush1.xpose.msra.mxu0 0.0
    %138 = vmatprep.subr.mxu0 0.0
    %139 = vmatpush1.xpose.msra.mxu0 0.0
    %140 = vmatprep.subr.mxu0 0.0
    %141 = vmatpush1.xpose.msra.mxu0 0.0
    %142 = vmatprep.subr.mxu0 0.0
    %143 = vmatpush1.xpose.msra.mxu0 0.0
    %144 = vmatprep.subr.mxu0 0.0
    %145 = vmatpush1.xpose.msra.mxu0 0.0
    %146 = vmatprep.subr.mxu0 0.0
    %147 = vmatpush1.xpose.msra.mxu0 0.0
    %148 = vmatprep.subr.mxu0 0.0
    %149 = vmatpush1.xpose.msra.mxu0 0.0
    %150 = vmatprep.subr.mxu0 0.0
    %151 = vmatpush1.xpose.msra.mxu0 0.0
    %152 = vmatprep.subr.mxu0 0.0
    %153 = vmatpush1.xpose.msra.mxu0 0.0
    %154 = vmatprep.subr.mxu0 0.0
    %155 = vmatpush1.xpose.msra.mxu0 0.0
    %156 = vmatprep.subr.mxu0 0.0
    %157 = vmatpush1.xpose.msra.mxu0 0.0
    %158 = vmatprep.subr.mxu0 0.0
    %159 = vmatpush1.xpose.msra.mxu0 0.0
    %160 = vmatprep.subr.mxu0 0.0
    %161 = vmatpush1.xpose.msra.mxu0 0.0
    %162 = vmatprep.subr.mxu0 0.0
    %163 = vmatpush1.xpose.msra.mxu0 0.0
    %164 = vmatprep.subr.mxu0 0.0
    %165 = vmatpush1.xpose.msra.mxu0 0.0
    %166 = vmatprep.mubr.f32.mxu0 0.0
    %167 = vmatmul.mubr.f32.gmra.mrb[0].mxu0 %v50
    %v168 = vpop.f32.mrb[0].mxu0
    %v169 = vadd.f32 %v42, %v168
    %v170 = vpop.f32.mrb[0].mxu0
    %171 = vmatprep.mubr.f32.mxu0 0.0
    %172 = vmatmul.mubr.f32.gmra.mrb[0].mxu0 %v52
    %v173 = vpop.f32.mrb[0].mxu0
    %v174 = vadd.f32 %v47, %v173
    %v175 = vpop.f32.mrb[0].mxu0
    %176 = vdwg.mxu0
    %v177 = vmax.f32 %v169, 0.0
    %v178 = vmax.f32 %v174, 0.0
    %180 = vset.pattern.permute.xlu0 16
    %181 = vperm.xlu0 %180, %v36
    %v182 = vpop.permute.xlu0 %181
    %185 = vset.pattern.permute.xlu0 16
    %186 = vperm.xlu0 %185, %v37
    %v187 = vpop.permute.xlu0 %186
    %vm189 = vcmask 130048
    %v190 = vsel %vm189, %v36, 0
    %v192 = vsel %vm189, %v37, 0
    %194 = vmatprep.subr.mxu0 0.0
    %195 = vmatpush1.msra.mxu0 %v177
    %196 = vmatprep.subr.mxu0 0.0
    %197 = vmatpush1.msra.mxu0 %v178
    %198 = vmatprep.subr.mxu0 0.0
    %199 = vmatpush1.msra.mxu0 0.0
    %200 = vmatprep.subr.mxu0 0.0
    %201 = vmatpush1.msra.mxu0 0.0
    %202 = vmatprep.subr.mxu0 0.0
    %203 = vmatpush1.msra.mxu0 0.0
    %204 = vmatprep.subr.mxu0 0.0
    %205 = vmatpush1.msra.mxu0 0.0
    %206 = vmatprep.subr.mxu0 0.0
    %207 = vmatpush1.msra.mxu0 0.0
    %208 = vmatprep.subr.mxu0 0.0
    %209 = vmatpush1.msra.mxu0 0.0
    %210 = vmatprep.subr.mxu0 0.0
    %211 = vmatpush1.msra.mxu0 0.0
    %212 = vmatprep.subr.mxu0 0.0
    %213 = vmatpush1.msra.mxu0 0.0
    %214 = vmatprep.subr.mxu0 0.0
    %215 = vmatpush1.msra.mxu0 0.0
    %216 = vmatprep.subr.mxu0 0.0
    %217 = vmatpush1.msra.mxu0 0.0
    %218 = vmatprep.subr.mxu0 0.0
    %219 = vmatpush1.msra.mxu0 0.0
    %220 = vmatprep.subr.mxu0 0.0
    %221 = vmatpush1.msra.mxu0 0.0
    %222 = vmatprep.subr.mxu0 0.0
    %223 = vmatpush1.msra.mxu0 0.0
    %224 = vmatprep.subr.mxu0 0.0
    %225 = vmatpush1.msra.mxu0 0.0
    %226 = vmatprep.subr.mxu0 0.0
    %227 = vmatpush1.msra.mxu0 0.0
    %228 = vmatprep.subr.mxu0 0.0
    %229 = vmatpush1.msra.mxu0 0.0
    %230 = vmatprep.subr.mxu0 0.0
    %231 = vmatpush1.msra.mxu0 0.0
    %232 = vmatprep.subr.mxu0 0.0
    %233 = vmatpush1.msra.mxu0 0.0
    %234 = vmatprep.subr.mxu0 0.0
    %235 = vmatpush1.msra.mxu0 0.0
    %236 = vmatprep.subr.mxu0 0.0
    %237 = vmatpush1.msra.mxu0 0.0
    %238 = vmatprep.subr.mxu0 0.0
    %239 = vmatpush1.msra.mxu0 0.0
    %240 = vmatprep.subr.mxu0 0.0
    %241 = vmatpush1.msra.mxu0 0.0
    %242 = vmatprep.subr.mxu0 0.0
    %243 = vmatpush1.msra.mxu0 0.0
    %244 = vmatprep.subr.mxu0 0.0
    %245 = vmatpush1.msra.mxu0 0.0
    %246 = vmatprep.subr.mxu0 0.0
    %247 = vmatpush1.msra.mxu0 0.0
    %248 = vmatprep.subr.mxu0 0.0
    %249 = vmatpush1.msra.mxu0 0.0
    %250 = vmatprep.subr.mxu0 0.0
    %251 = vmatpush1.msra.mxu0 0.0
    %252 = vmatprep.subr.mxu0 0.0
    %253 = vmatpush1.msra.mxu0 0.0
    %254 = vmatprep.subr.mxu0 0.0
    %255 = vmatpush1.msra.mxu0 0.0
    %256 = vmatprep.subr.mxu0 0.0
    %257 = vmatpush1.msra.mxu0 0.0
    %258 = vmatprep.mubr.f32.mxu0 0.0
    %259 = vmatmul.mubr.f32.gmra.mrb[0].mxu0 %v190
    %v260 = vpop.f32.mrb[0].mxu0
    %v261 = vadd.f32 %v182, %v260
    %v262 = vpop.f32.mrb[0].mxu0
    %263 = vmatprep.mubr.f32.mxu0 0.0
    %264 = vmatmul.mubr.f32.gmra.mrb[0].mxu0 %v192
    %v265 = vpop.f32.mrb[0].mxu0
    %v266 = vadd.f32 %v187, %v265
    %v267 = vpop.f32.mrb[0].mxu0
    %268 = vdwg.mxu0
    %v269 = vmax.f32 %v261, 0.0
    %v270 = vmax.f32 %v266, 0.0
    %272 = vset.pattern.permute.xlu0 16
    %273 = vperm.xlu0 %272, %v38
    %v274 = vpop.permute.xlu0 %273
    %v276 = vlaneseq
    %v277 = vshrl.u32 %v276, 7
    %v278 = vsub.s32 0, %v277
    %v279 = vrot.slane %v274, %v278
    %v280 = vsel %vm189, %v38, 0
    %282 = vmatprep.subr.mxu0 0.0
    %283 = vmatpush1.msra.mxu0 %v269
    %284 = vmatprep.subr.mxu0 0.0
    %285 = vmatpush1.msra.mxu0 %v270
    %286 = vmatprep.subr.mxu0 0.0
    %287 = vmatpush1.msra.mxu0 0.0
    %288 = vmatprep.subr.mxu0 0.0
    %289 = vmatpush1.msra.mxu0 0.0
    %290 = vmatprep.subr.mxu0 0.0
    %291 = vmatpush1.msra.mxu0 0.0
    %292 = vmatprep.subr.mxu0 0.0
    %293 = vmatpush1.msra.mxu0 0.0
    %294 = vmatprep.subr.mxu0 0.0
    %295 = vmatpush1.msra.mxu0 0.0
    %296 = vmatprep.subr.mxu0 0.0
    %297 = vmatpush1.msra.mxu0 0.0
    %298 = vmatprep.subr.mxu0 0.0
    %299 = vmatpush1.msra.mxu0 0.0
    %300 = vmatprep.subr.mxu0 0.0
    %301 = vmatpush1.msra.mxu0 0.0
    %302 = vmatprep.subr.mxu0 0.0
    %303 = vmatpush1.msra.mxu0 0.0
    %304 = vmatprep.subr.mxu0 0.0
    %305 = vmatpush1.msra.mxu0 0.0
    %306 = vmatprep.subr.mxu0 0.0
    %307 = vmatpush1.msra.mxu0 0.0
    %308 = vmatprep.subr.mxu0 0.0
    %309 = vmatpush1.msra.mxu0 0.0
    %310 = vmatprep.subr.mxu0 0.0
    %311 = vmatpush1.msra.mxu0 0.0
    %312 = vmatprep.subr.mxu0 0.0
    %313 = vmatpush1.msra.mxu0 0.0
    %314 = vmatprep.subr.mxu0 0.0
    %315 = vmatpush1.msra.mxu0 0.0
    %316 = vmatprep.subr.mxu0 0.0
    %317 = vmatpush1.msra.mxu0 0.0
    %318 = vmatprep.subr.mxu0 0.0
    %319 = vmatpush1.msra.mxu0 0.0
    %320 = vmatprep.subr.mxu0 0.0
    %321 = vmatpush1.msra.mxu0 0.0
    %322 = vmatprep.subr.mxu0 0.0
    %323 = vmatpush1.msra.mxu0 0.0
    %324 = vmatprep.subr.mxu0 0.0
    %325 = vmatpush1.msra.mxu0 0.0
    %326 = vmatprep.subr.mxu0 0.0
    %327 = vmatpush1.msra.mxu0 0.0
    %328 = vmatprep.subr.mxu0 0.0
    %329 = vmatpush1.msra.mxu0 0.0
    %330 = vmatprep.subr.mxu0 0.0
    %331 = vmatpush1.msra.mxu0 0.0
    %332 = vmatprep.subr.mxu0 0.0
    %333 = vmatpush1.msra.mxu0 0.0
    %334 = vmatprep.subr.mxu0 0.0
    %335 = vmatpush1.msra.mxu0 0.0
    %336 = vmatprep.subr.mxu0 0.0
    %337 = vmatpush1.msra.mxu0 0.0
    %338 = vmatprep.subr.mxu0 0.0
    %339 = vmatpush1.msra.mxu0 0.0
    %340 = vmatprep.subr.mxu0 0.0
    %341 = vmatpush1.msra.mxu0 0.0
    %342 = vmatprep.subr.mxu0 0.0
    %343 = vmatpush1.msra.mxu0 0.0
    %344 = vmatprep.subr.mxu0 0.0
    %345 = vmatpush1.msra.mxu0 0.0
    %346 = vmatprep.mubr.f32.mxu0 0.0
    %347 = vmatmul.mubr.f32.gmra.mrb[0].mxu0 %v280
    %v348 = vpop.f32.mrb[0].mxu0
    %v349 = vadd.f32 %v279, %v348
    %v350 = vpop.f32.mrb[0].mxu0
    %351 = vdwg.mxu0
    %v352 = vtanh.pop %v349
    %v353 = vmul.f32 %v352, 2.0
    %354 = vst [vmem:[#allocation2] sm:$0x1] %v353
    // Predicated region
    $region18: #{tpu_custom_call.1} parent=1 // pred_check
      _
    $region19: #{tpu_custom_call.1} parent=1 // pred_check_branch
      %356 = sbr.rel (0) target = $region21
    $region20: #{tpu_custom_call.1} parent=1 // pred_region
      %s358 = ssub.s32 16, 16
      %359 = vsyncadd [#allocation3], %s358
      %s361 = sshll.u32 [#allocation2], 4
      %s362 = int_to_ptr.vmem [resolvable:$true] %s361
      %364 = dma.vmem_to_hbm [thread:$0]  %s362, 16, %s4, [#allocation3]
    $region21: #{tpu_custom_call.1} parent=1 // pred_fallthru
      _
    // Predicated region
    $region22: #{tpu_custom_call.1} parent=1 // pred_check
      _
    $region23: #{tpu_custom_call.1} parent=1 // pred_check_branch
      %366 = sbr.rel (0) target = $region25
    $region24: #{tpu_custom_call.1} parent=1 // pred_region
      %367 = dma.done [#allocation3], 16
    $region25: #{tpu_custom_call.1} parent=1 // pred_fallthru
      _
    %368 = vsyncpa [#allocation3], 1

</llo_original>
